<compile_context>
chip_gen: v5e
topology: v5e:2x2
jax: 0.10.0
libtpu: 0.0.40
codegen_flags: <defaults>
</compile_context>

<pallas_src>
import math

import jax
import jax.numpy as jnp
from jax.experimental import pallas as pl
from jax.experimental.pallas import tpu as pltpu

LANE = 128  # lane width (last-dim tiling unit)


def _round_up(x: int, m: int) -> int:
    return ((x + m - 1) // m) * m


def _sublane(*dtypes) -> int:
    """Native sublane multiple: 8 rows for 4-byte, 16 for 2-byte, 32 for 1-byte."""
    return max(max(8, 32 // jnp.dtype(d).itemsize) for d in dtypes)


def _vmem_budget_and_limit():
    """Per-generation VMEM budget (tile sizing) and scoped-VMEM limit (compiler)."""
    try:
        cap = int(pltpu.get_tpu_info().vmem_capacity_bytes)
    except Exception:
        cap = 64 << 20  # conservative fallback: v7x per-TC VMEM
    budget = min(int(cap * 0.60), 64 << 20)   # ~38 MiB on v7x, 64 MiB on v5e/v6e
    limit = min(int(cap * 0.75), 96 << 20)    # explicit scoped-VMEM ceiling
    return budget, limit


# ---------------------------------------------------------------------------
# Parameters (mirror DenseLayer.__init__; PyTorch layout: weight (c_out, c_in)).
# ---------------------------------------------------------------------------

def make_dense_layer_params(key, c_in: int, c_out: int, zero_init: bool = False):
    if zero_init:
        weight = jnp.zeros((c_out, c_in), dtype=jnp.float32)
    else:
        bound = math.sqrt(6.0 / (c_in + c_out))
        weight = jax.random.uniform(key, (c_out, c_in), jnp.float32, -bound, bound)
    bias = jnp.zeros((c_out,), dtype=jnp.float32)
    return weight, bias


def prepare_dense_params(weight: jax.Array, bias: jax.Array, param_dtype=None):
    """One-time param prep (at init, not per forward):
       - transpose weight to (c_in, c_out) for the MXU,
       - zero-pad the output dim to a multiple of 128 lanes (lane-dense stores),
       - optionally store the weight in a narrower dtype (e.g. bf16) to halve DMA.
       Bias stays f32 (added to the f32 accumulator).
       Returns (wT_padded (c_in, c_out_p), bias_padded (1, c_out_p), c_out)."""
    c_out, c_in = weight.shape
    c_out_p = _round_up(c_out, LANE)
    w = weight if param_dtype is None else weight.astype(param_dtype)
    wT_p = jnp.zeros((c_in, c_out_p), w.dtype).at[:, :c_out].set(w.T)
    b_p = jnp.zeros((1, c_out_p), jnp.float32).at[:, :c_out].set(bias.astype(jnp.float32))
    return wT_p, b_p, c_out


# ---------------------------------------------------------------------------
# Kernels
# ---------------------------------------------------------------------------

def _dense_kernel_resident(x_ref, wT_ref, b_ref, o_ref):
    # Weight/bias are VMEM-resident across the row-tile grid; x/out tiles stream.
    w = wT_ref[...]
    acc = jnp.dot(x_ref[...].astype(w.dtype), w, preferred_element_type=jnp.float32)
    o_ref[...] = (acc + b_ref[...]).astype(o_ref.dtype)


def _dense_kernel_tiled(x_ref, wT_ref, b_ref, o_ref, acc_ref):
    # (i, j, k) tiled GEMM with an f32 VMEM accumulator; k (reduction) is last.
    @pl.when(pl.program_id(2) == 0)
    def _():
        acc_ref[...] = jnp.zeros_like(acc_ref)

    w = wT_ref[...]
    acc_ref[...] += jnp.dot(x_ref[...].astype(w.dtype), w,
                            preferred_element_type=jnp.float32)

    @pl.when(pl.program_id(2) == pl.num_programs(2) - 1)
    def _():
        o_ref[...] = (acc_ref[...] + b_ref[...]).astype(o_ref.dtype)


# ---------------------------------------------------------------------------
# Tile planning
# ---------------------------------------------------------------------------

def _choose_tile_n_resident(n, c_in, c_out_p, x_isz, w_isz, o_isz, sublane,
                            budget, max_tile_n=4096):
    """Row-tile size for the weight-resident path; None if the weight won't fit."""
    # Invariant weight/bias blocks are still double-buffered by the auto pipeline.
    resident = 2 * (c_in * c_out_p * w_isz + 8 * c_out_p * 4)
    row = 2 * (c_in * x_isz + c_out_p * o_isz)        # double-buffered x + out rows
    avail = budget - resident
    if avail < row * sublane:
        return None                                   # -> tiled j/K fallback
    tile = min((avail // row) // sublane * sublane, max_tile_n)
    if n > sublane:                                   # keep both v7x TCs busy
        tile = min(tile, _round_up(pl.cdiv(n, 2), sublane))
    return max(tile, sublane)


def _plan_tiled(n, c_in, c_out_p, x_isz, w_isz, o_isz, sublane, budget):
    """(tile_n, tile_co, tile_k) for the (i, j, k) tiled path."""
    # tile_k must divide c_in exactly (ragged K would accumulate garbage) and be
    # a 128-multiple for the x block's last dim; otherwise use the full K.
    tile_k = next((c for c in (1024, 512, 256, 128) if c_in % c == 0), c_in)
    tile_co = c_out_p if c_out_p <= 512 else 512
    while tile_co > 128 and c_out_p > 512 and 2 * tile_k * tile_co * w_isz > budget // 2:
        tile_co //= 2                                  # 512 -> 256 -> 128 (all 128-multiples)
    row = 2 * tile_k * x_isz + 2 * tile_co * o_isz + tile_co * 4   # x, out, f32 acc
    avail = max(budget - 2 * (tile_k * tile_co * w_isz + 8 * tile_co * 4), row * sublane)
    tile_n = max(sublane, min((avail // row) // sublane * sublane, 1024))
    if n > sublane:
        tile_n = min(tile_n, _round_up(pl.cdiv(n, 2), sublane))
    return tile_n, tile_co, tile_k


# ---------------------------------------------------------------------------
# Forward
# ---------------------------------------------------------------------------

def dense_layer(node_feats: jax.Array, wT_p: jax.Array, b_p: jax.Array, c_out: int,
                *, tile_n: int | None = None, force_tiled: bool = False,
                unpad_output: bool = True) -> jax.Array:
    """node_feats: (N, c_in); wT_p: (c_in, c_out_p); b_p: (1, c_out_p).
       Returns (N, c_out) (or (N, c_out_p) when unpad_output=False)."""
    n, c_in = node_feats.shape
    assert wT_p.shape[0] == c_in and wT_p.shape[1] == b_p.shape[1]
    c_out_p = wT_p.shape[1]
    out_dtype = node_feats.dtype
    x_isz = jnp.dtype(node_feats.dtype).itemsize
    w_isz = jnp.dtype(wT_p.dtype).itemsize
    o_isz = jnp.dtype(out_dtype).itemsize
    sublane = _sublane(node_feats.dtype, out_dtype)

    budget, vmem_limit = _vmem_budget_and_limit()

    plan_resident = None
    if not force_tiled:
        if tile_n is not None:
            plan_resident = max(sublane, _round_up(int(tile_n), sublane))
        else:
            plan_resident = _choose_tile_n_resident(
                n, c_in, c_out_p, x_isz, w_isz, o_isz, sublane, budget)

    if plan_resident is not None:
        # ------------------- weight-resident streaming path -------------------
        tn = plan_resident
        grid = (pl.cdiv(n, tn),)
        cost = pl.CostEstimate(
            flops=2 * grid[0] * tn * c_in * c_out_p,
            transcendentals=0,
            bytes_accessed=(n * c_in * x_isz + c_in * c_out_p * w_isz
                            + c_out_p * 4 + n * c_out_p * o_isz),
        )
        out = pl.pallas_call(
            _dense_kernel_resident,
            out_shape=jax.ShapeDtypeStruct((n, c_out_p), out_dtype),
            grid_spec=pltpu.PrefetchScalarGridSpec(
                num_scalar_prefetch=0,
                grid=grid,
                in_specs=[
                    pl.BlockSpec((tn, c_in), lambda i: (i, 0)),       # x tiles stream
                    pl.BlockSpec((c_in, c_out_p), lambda i: (0, 0)),  # weight, grid-invariant
                    pl.BlockSpec((1, c_out_p), lambda i: (0, 0)),     # bias, grid-invariant
                ],
                out_specs=pl.BlockSpec((tn, c_out_p), lambda i: (i, 0)),
            ),
            compiler_params=pltpu.CompilerParams(
                dimension_semantics=("parallel",),
                vmem_limit_bytes=vmem_limit),
            cost_estimate=cost,
        )(node_feats, wT_p, b_p)
    else:
        # --------------- tiled (i, j, k) path for large weights ---------------
        tn, tco, tk = _plan_tiled(n, c_in, c_out_p, x_isz, w_isz, o_isz,
                                  sublane, budget)
        grid = (pl.cdiv(n, tn), pl.cdiv(c_out_p, tco), pl.cdiv(c_in, tk))
        cost = pl.CostEstimate(
            flops=2 * grid[0] * tn * c_in * c_out_p,
            transcendentals=0,
            bytes_accessed=(n * c_in * x_isz + grid[0] * c_in * c_out_p * w_isz
                            + c_out_p * 4 + n * c_out_p * o_isz),
        )
        out = pl.pallas_call(
            _dense_kernel_tiled,
            out_shape=jax.ShapeDtypeStruct((n, c_out_p), out_dtype),
            grid_spec=pltpu.PrefetchScalarGridSpec(
                num_scalar_prefetch=0,
                grid=grid,
                in_specs=[
                    pl.BlockSpec((tn, tk), lambda i, j, k: (i, k)),
                    pl.BlockSpec((tk, tco), lambda i, j, k: (k, j)),
                    pl.BlockSpec((1, tco), lambda i, j, k: (0, j)),
                ],
                out_specs=pl.BlockSpec((tn, tco), lambda i, j, k: (i, j)),
                scratch_shapes=[pltpu.VMEM((tn, tco), jnp.float32)],
            ),
            compiler_params=pltpu.CompilerParams(
                dimension_semantics=("parallel", "parallel", "arbitrary"),
                vmem_limit_bytes=vmem_limit),
            cost_estimate=cost,
        )(node_feats, wT_p, b_p)

    if unpad_output and c_out != c_out_p:
        out = out[:, :c_out]
    return out


# ---------------------------------------------------------------------------
# Demo / self-test
# ---------------------------------------------------------------------------

if __name__ == "__main__":
    key = jax.random.PRNGKey(0)
    k_x, k_w = jax.random.split(key)

    N, C_IN, C_OUT = 64, 32, 16
    x = jax.random.normal(k_x, (N, C_IN), dtype=jnp.float32)
    weight, bias = make_dense_layer_params(k_w, C_IN, C_OUT, zero_init=False)

    # One-time parameter preparation (transpose + lane padding).
    wT_p, b_p, c_out = prepare_dense_params(weight, bias)

    # Reference (same semantics as nn.Linear forward).
    y_ref = x @ weight.T + bias

    # Default path (auto tile, weight-resident).
    y = dense_layer(x, wT_p, b_p, c_out)
    jax.block_until_ready(y)
    assert y.shape == (N, C_OUT)
    assert jnp.allclose(y, y_ref, atol=1e-5, rtol=1e-5)

    # Ragged N + multiple grid steps (no host-side pad and no row-slice copy).
    y2 = dense_layer(x[: N - 3], wT_p, b_p, c_out, tile_n=16)
    jax.block_until_ready(y2)
    assert y2.shape == (N - 3, C_OUT)
    assert jnp.allclose(y2, y_ref[: N - 3], atol=1e-5, rtol=1e-5)

    # Tiled (i, j, k) accumulator path — selected automatically when the weight
    # block does not fit the VMEM budget; forced here to exercise it.
    y3 = dense_layer(x, wT_p, b_p, c_out, force_tiled=True)
    jax.block_until_ready(y3)
    assert jnp.allclose(y3, y_ref, atol=1e-5, rtol=1e-5)

    # bf16 weight path (half the weight DMA bytes, bf16 MXU rate, f32 accumulate).
    wT_bf, b_bf, _ = prepare_dense_params(weight, bias, param_dtype=jnp.bfloat16)
    y4 = dense_layer(x, wT_bf, b_bf, c_out)
    jax.block_until_ready(y4)
    assert jnp.allclose(y4, y_ref, atol=1e-1, rtol=1e-1)

    # Padded-output mode: keep lane-dense (N, c_out_p); pad columns are zero.
    y5 = dense_layer(x, wT_p, b_p, c_out, unpad_output=False)
    jax.block_until_ready(y5)
    assert y5.shape[1] % 128 == 0
    assert jnp.allclose(y5[:, :c_out], y_ref, atol=1e-5, rtol=1e-5)
    assert jnp.all(y5[:, c_out:] == 0)

    print("KERNEL_OK")
</pallas_src>

<mosaic_0001>
module attributes {stable_mosaic.version = 11 : i64} {
  func.func @_dense_kernel_resident(%arg0: i32, %arg1: memref<32x32xf32, #tpu.memory_space<vmem>>, %arg2: memref<32x128xf32, #tpu.memory_space<vmem>>, %arg3: memref<1x128xf32, #tpu.memory_space<vmem>>, %arg4: memref<32x128xf32, #tpu.memory_space<vmem>>) attributes {dimension_semantics = [#tpu.dimension_semantics<parallel>], iteration_bounds = array<i64: 2>, scalar_prefetch = 0 : i64, scratch_operands = 0 : i64, tpu.core_type = #tpu.core_type<tc>, window_params = [{transform_indices = @transform_0, window_bounds = array<i64: 32, 32>}, {pipeline_mode = #tpu.pipeline_mode<synchronous>, transform_indices = @transform_1, window_bounds = array<i64: 32, 128>}, {pipeline_mode = #tpu.pipeline_mode<synchronous>, transform_indices = @transform_2, window_bounds = array<i64: 1, 128>}, {transform_indices = @transform_3, window_bounds = array<i64: 32, 128>}]} {
    %c0 = arith.constant 0 : index
    %c0_0 = arith.constant 0 : index
    %0 = vector.load %arg2[%c0, %c0_0] : memref<32x128xf32, #tpu.memory_space<vmem>>, vector<32x128xf32>
    %c0_1 = arith.constant 0 : index
    %c0_2 = arith.constant 0 : index
    %1 = vector.load %arg1[%c0_1, %c0_2] : memref<32x32xf32, #tpu.memory_space<vmem>>, vector<32x32xf32>
    %cst = arith.constant dense<0.000000e+00> : vector<32x128xf32>
    %2 = tpu.matmul %1, %0, %cst {dimension_numbers = #tpu.dot_dimension_numbers<[1], [0], [0], [1], [0, 0, 1, 1], [], []>} : vector<32x32xf32>, vector<32x128xf32>, vector<32x128xf32> -> vector<32x128xf32>
    %c0_3 = arith.constant 0 : index
    %c0_4 = arith.constant 0 : index
    %3 = vector.load %arg3[%c0_3, %c0_4] : memref<1x128xf32, #tpu.memory_space<vmem>>, vector<1x128xf32>
    %4 = vector.broadcast %3 : vector<1x128xf32> to vector<32x128xf32>
    %5 = arith.addf %2, %4 : vector<32x128xf32>
    %c0_5 = arith.constant 0 : index
    %c0_6 = arith.constant 0 : index
    %6 = vector.load %arg4[%c0_5, %c0_6] : memref<32x128xf32, #tpu.memory_space<vmem>>, vector<32x128xf32>
    tpu.vector_store %arg4[%c0_5, %c0_6], %5 {strides = array<i32>} : memref<32x128xf32, #tpu.memory_space<vmem>>, vector<32x128xf32>,
    return
  }
  func.func @transform_0(%arg0: i32) -> (i32, i32) {
    %c0_i32 = arith.constant 0 : i32
    %c0_i32_0 = arith.constant 0 : i32
    return %arg0, %c0_i32 : i32, i32
  }
  func.func @transform_1(%arg0: i32) -> (i32, i32) {
    %c0_i32 = arith.constant 0 : i32
    %c0_i32_0 = arith.constant 0 : i32
    %c0_i32_1 = arith.constant 0 : i32
    return %c0_i32, %c0_i32_0 : i32, i32
  }
  func.func @transform_2(%arg0: i32) -> (i32, i32) {
    %c0_i32 = arith.constant 0 : i32
    %c0_i32_0 = arith.constant 0 : i32
    %c0_i32_1 = arith.constant 0 : i32
    return %c0_i32, %c0_i32_0 : i32, i32
  }
  func.func @transform_3(%arg0: i32) -> (i32, i32) {
    %c0_i32 = arith.constant 0 : i32
    %c0_i32_0 = arith.constant 0 : i32
    return %arg0, %c0_i32 : i32, i32
  }
}

</mosaic_0001>

<llo_original>
// kernel: tpu_custom_call.1
$region0: #{tpu_custom_call.1}
  #allocation0 [shape = 'u32[]', space=smem, size = 0x4, offset = 0x4, fixed_abs, tag = 'smem constant byte address 0x4 - core index']
  #allocation1 [shape = 'u32[72,128]{1,0:T(1,128)}', space=vmem, size = 0x9000, scoped, tag = 'internal scratch']
  %s0 = inlined_call_operand.vmem [shape: f32[64,32], index: 0, kind: input, shape index: {}]
  %s1 = inlined_call_operand.vmem [shape: f32[32,128], index: 1, kind: input, shape index: {}]
  %s2 = inlined_call_operand.vmem [shape: f32[1,128], index: 2, kind: input, shape index: {}]
  %s3 = inlined_call_operand.hbm [shape: f32[64,128], index: 3, kind: output, shape index: {}]
  %s4 = sld [smem:[#allocation0]]
  $region45: #{tpu_custom_call.1} parent=0
    _
  %s6 = ssub.s32 1, %s4
  %s7 = scalar_select 0, %s6, %s4
  $region1: #{tpu_custom_call.1} parent=0
    #allocation2 [shape = 'u8[32768]{0}', space=vmem, size = 0x8000, scoped, tag = 'output window, operand 0']
    #allocation3 [shape = 's32[2]{0}', space=sflag, size = 0x8, scoped, tag = 'scoped memory for tpu_custom_call.1']
    %8 = vsyncpa [#allocation3], 0
    %s9 = scalar_lea.sflag [#allocation3], 1
    %10 = vsyncpa %s9, 0
    loop: start=0, step=1, limit=4
    $region2: #{tpu_custom_call.1} parent=1 // loop_pre_header
      _
    $region3: #{tpu_custom_call.1} parent=1 // loop_header
      %s12 = sphi 0, %s16
      %p13 = scmp.ge.s32.totalorder %s12, 4
      %s22 = sphi 0, %s24
      %s25 = sphi 0, %s22
      %s26 = sphi 0, %s25
      %s42 = sphi 0, %s26
      %s46 = sphi 0, %s46
      %s48 = sphi 0, %s46
      %s49 = sphi 0, %s48
      %s63 = sphi 0, %s49
      %s67 = sphi 0, %s67
      %s69 = sphi 0, %s67
      %s70 = sphi 0, %s69
      %s84 = sphi 0, %s70
      %s90 = sphi 0, %s92
      %s93 = sphi 0, %s90
      %s94 = sphi 0, %s93
      %s110 = sphi 0, %s94
    $region4: #{tpu_custom_call.1} parent=1 // loop_header_branch
      %15 = sbr.rel (%p13) target = $region8
    $region5: #{tpu_custom_call.1} parent=1 // loop_body
      %s17 = ssub.s32 %s12, 1
      %s18 = ssub.s32 %s12, 2
      %s19 = sadd.s32 %s12, 1
      %s20 = ssub.s32 %s12, %s19
      %p21 = scmp.eq.s32.totalorder %s20, 0
      %s23 = sadd.s32 %s22, 1
      %s24 = scalar_select %p21, %s22, %s23
      %p27 = pneg %p21
      %p28 = scmp.eq.s32.totalorder %s12, 1
      %p29 = por %p27, %p28
      %p30 = scmp.ne.s32.totalorder %s22, %s25
      %p31 = scmp.eq.s32.totalorder %s12, 0
      %p32 = por %p30, %p31
      %p33 = scmp.ne.s32.totalorder %s22, %s25
      %p34 = scmp.eq.s32.totalorder %s17, 1
      %p35 = por %p33, %p34
      %p36 = scmp.ne.s32.totalorder %s25, %s26
      %p37 = scmp.eq.s32.totalorder %s17, 0
      %p38 = por %p36, %p37
      %p39 = scmp.ne.s32.totalorder %s25, %s26
      %p40 = scmp.eq.s32.totalorder %s18, 1
      %p41 = por %p39, %p40
      %p43 = scmp.ne.s32.totalorder %s26, %s42
      %p44 = scmp.eq.s32.totalorder %s18, 0
      %p45 = por %p43, %p44
      %s47 = sadd.s32 %s46, 1
      %p50 = scmp.eq.s32.totalorder %s12, 1
      %p51 = scmp.ne.s32.totalorder %s46, %s48
      %p52 = scmp.eq.s32.totalorder %s12, 0
      %p53 = por %p51, %p52
      %p54 = scmp.ne.s32.totalorder %s46, %s48
      %p55 = scmp.eq.s32.totalorder %s17, 1
      %p56 = por %p54, %p55
      %p57 = scmp.ne.s32.totalorder %s48, %s49
      %p58 = scmp.eq.s32.totalorder %s17, 0
      %p59 = por %p57, %p58
      %p60 = scmp.ne.s32.totalorder %s48, %s49
      %p61 = scmp.eq.s32.totalorder %s18, 1
      %p62 = por %p60, %p61
      %p64 = scmp.ne.s32.totalorder %s49, %s63
      %p65 = scmp.eq.s32.totalorder %s18, 0
      %p66 = por %p64, %p65
      %s68 = sadd.s32 %s67, 1
      %p71 = scmp.eq.s32.totalorder %s12, 1
      %p72 = scmp.ne.s32.totalorder %s67, %s69
      %p73 = scmp.eq.s32.totalorder %s12, 0
      %p74 = por %p72, %p73
      %p75 = scmp.ne.s32.totalorder %s67, %s69
      %p76 = scmp.eq.s32.totalorder %s17, 1
      %p77 = por %p75, %p76
      %p78 = scmp.ne.s32.totalorder %s69, %s70
      %p79 = scmp.eq.s32.totalorder %s17, 0
      %p80 = por %p78, %p79
      %p81 = scmp.ne.s32.totalorder %s69, %s70
      %p82 = scmp.eq.s32.totalorder %s18, 1
      %p83 = por %p81, %p82
      %p85 = scmp.ne.s32.totalorder %s70, %s84
      %p86 = scmp.eq.s32.totalorder %s18, 0
      %p87 = por %p85, %p86
      %s88 = ssub.s32 %s12, %s19
      %p89 = scmp.eq.s32.totalorder %s88, 0
      %s91 = sadd.s32 %s90, 1
      %s92 = scalar_select %p89, %s90, %s91
      %p95 = pneg %p89
      %p96 = scmp.eq.s32.totalorder %s12, 1
      %p97 = por %p95, %p96
      %p98 = scmp.ne.s32.totalorder %s90, %s93
      %p99 = scmp.eq.s32.totalorder %s12, 0
      %p100 = por %p98, %p99
      %p101 = scmp.ne.s32.totalorder %s90, %s93
      %p102 = scmp.eq.s32.totalorder %s17, 1
      %p103 = por %p101, %p102
      %p104 = scmp.ne.s32.totalorder %s93, %s94
      %p105 = scmp.eq.s32.totalorder %s17, 0
      %p106 = por %p104, %p105
      %p107 = scmp.ne.s32.totalorder %s93, %s94
      %p108 = scmp.eq.s32.totalorder %s18, 1
      %p109 = por %p107, %p108
      %p111 = scmp.ne.s32.totalorder %s94, %s110
      %p112 = scmp.eq.s32.totalorder %s18, 0
      %p113 = por %p111, %p112
      %p114 = scmp.le.s32.totalorder 1, %s12
      %p115 = scmp.lt.s32.totalorder %s12, 3
      %p116 = pnand %p114, %p115
      %p117 = pneg %p116
      // Predicated region
      $region9: #{tpu_custom_call.1} parent=5 // pred_check
        _
      $region10: #{tpu_custom_call.1} parent=5 // pred_check_branch
        %119 = sbr.rel (%p116) target = $region12
      $region11: #{tpu_custom_call.1} parent=5 // pred_region
        %s120 = ssub.s32 %s12, 1
        // Predicated region
        $region13: #{tpu_custom_call.1} parent=11 // pred_check
          %p121 = pneg %p59
        $region14: #{tpu_custom_call.1} parent=11 // pred_check_branch
          %123 = sbr.rel (%p121) target = $region16
        $region15: #{tpu_custom_call.1} parent=11 // pred_region
          _
        $region16: #{tpu_custom_call.1} parent=11 // pred_fallthru
          _
        // Predicated region
        $region17: #{tpu_custom_call.1} parent=11 // pred_check
          %p124 = pneg %p80
        $region18: #{tpu_custom_call.1} parent=11 // pred_check_branch
          %126 = sbr.rel (%p124) target = $region20
        $region19: #{tpu_custom_call.1} parent=11 // pred_region
          _
        $region20: #{tpu_custom_call.1} parent=11 // pred_fallthru
          _
      $region12: #{tpu_custom_call.1} parent=5 // pred_fallthru
        _
      %p127 = scmp.lt.s32.totalorder %s12, 2
      // Predicated region
      $region21: #{tpu_custom_call.1} parent=5 // pred_check
        %p128 = pneg %p127
      $region22: #{tpu_custom_call.1} parent=5 // pred_check_branch
        %130 = sbr.rel (%p128) target = $region24
      $region23: #{tpu_custom_call.1} parent=5 // pred_region
        // Predicated region
        $region25: #{tpu_custom_call.1} parent=23 // pred_check
          %p131 = pneg %p32
        $region26: #{tpu_custom_call.1} parent=23 // pred_check_branch
          %133 = sbr.rel (%p131) target = $region28
        $region27: #{tpu_custom_call.1} parent=23 // pred_region
          %s134 = smul.u32 4, %s12
          %p135 = scmp.lt.s32.totalorder %s134, 7
          %s136 = scalar_select %p135, %s134, 7
          %s137 = smul.addr %s136, 8
          %s138 = scalar_lea.vmem %s0, %s137
          %s139 = smul.u32 4, %s12
        $region28: #{tpu_custom_call.1} parent=23 // pred_fallthru
          _
      $region24: #{tpu_custom_call.1} parent=5 // pred_fallthru
        _
      %p140 = scmp.le.s32.totalorder 1, %s12
      %p141 = scmp.lt.s32.totalorder %s12, 3
      %p142 = pnand %p140, %p141
      %p143 = pneg %p142
      // Predicated region
      $region29: #{tpu_custom_call.1} parent=5 // pred_check
        _
      $region30: #{tpu_custom_call.1} parent=5 // pred_check_branch
        %145 = sbr.rel (%p142) target = $region32
      $region31: #{tpu_custom_call.1} parent=5 // pred_region
        %s146 = ssub.s32 %s12, 1
        %s147 = smul.u32 4, %s17
        %p148 = scmp.lt.s32.totalorder %s147, 7
        %s149 = scalar_select %p148, %s147, 7
        %s150 = smul.addr %s149, 8
        %s151 = scalar_lea.vmem %s0, %s150
        %p152 = pneg %p38
        %p153 = pneg %p35
        %p154 = pneg %p59
        %p155 = pneg %p56
        %p156 = pneg %p80
        %p157 = pneg %p77
        %p158 = pneg %p106
        %p159 = pneg %p103
        %s160 = sand.u32 %s93, 1
        %s161 = scalar_lea.sflag [#allocation3], %s160
        %s162 = sand.u32 %s93, 1
        %s163 = smul.addr %s162, 32
        %s164 = scalar_lea.vmem [#allocation2], %s163
        %s165 = smul.u32 4, %s17
        %p166 = scmp.lt.s32.totalorder %s165, 7
        %s167 = scalar_select %p166, %s165, 7
        %s168 = smul.addr %s167, 8
        %s169 = scalar_lea.vmem %s0, %s168
        %s170 = smul.u32 4, %s17
        %s171 = smul.u32 4, %s17
        %v172 = vld [vmem:[%s1] sm:$0xff]
        %v173 = vld [vmem:[%s1 + $0x8] sm:$0xff]
        %v174 = vld [vmem:[%s1 + $0x10] sm:$0xff]
        %v175 = vld [vmem:[%s1 + $0x18] sm:$0xff]
        %v176 = vld [vmem:[%s169] sm:$0xff]
        %v177 = vld [vmem:[%s169 + $0x8] sm:$0xff]
        %v178 = vld [vmem:[%s169 + $0x10] sm:$0xff]
        %v179 = vld [vmem:[%s169 + $0x18] sm:$0xff]
        %v180 = vld [vmem:[%s2] sm:$0x1]
        %v182 = vperm.slane %v180, 0
        %vm184 = vcmask 261120
        %v186 = vsel %vm184, %v176, 0
        %v189 = vsel %vm184, %v177, 0
        %v192 = vsel %vm184, %v178, 0
        %v195 = vsel %vm184, %v179, 0
        %197 = vmatpush.msra.mxu0 0.0
        %198 = vmatpush.msra.mxu0 0.0
        %199 = vmatpush.msra.mxu0 0.0
        %200 = vmatpush.msra.mxu0 0.0
        %201 = vmatpush.msra.mxu0 0.0
        %202 = vmatpush.msra.mxu0 0.0
        %203 = vmatpush.msra.mxu0 0.0
        %204 = vmatpush.msra.mxu0 0.0
        %205 = vmatpush.msra.mxu0 0.0
        %206 = vmatpush.msra.mxu0 0.0
        %207 = vmatpush.msra.mxu0 0.0
        %208 = vmatpush.msra.mxu0 0.0
        %209 = vmatpush.msra.mxu0 %v175
        %210 = vmatpush.msra.mxu0 %v174
        %211 = vmatpush.msra.mxu0 %v173
        %212 = vmatpush.msra.mxu0 %v172
        %213 = vmatmul.f32.gmra.mxu0 %v186
        %v214 = vpop.f32.mrf.mxu0
        %v215 = vadd.f32 %v182, %v214
        %216 = vmatmul.f32.gmra.mxu0 %v189
        %v217 = vpop.f32.mrf.mxu0
        %v218 = vadd.f32 %v182, %v217
        %219 = vmatmul.f32.gmra.mxu0 %v192
        %v220 = vpop.f32.mrf.mxu0
        %v221 = vadd.f32 %v182, %v220
        %222 = vmatmul.f32.gmra.mxu0 %v195
        %v223 = vpop.f32.mrf.mxu0
        %v224 = vadd.f32 %v182, %v223
        %225 = vdwg.mxu0
        %226 = vst [vmem:[%s164] sm:$0xff] %v215
        %227 = vst [vmem:[%s164 + $0x8] sm:$0xff] %v218
        %228 = vst [vmem:[%s164 + $0x10] sm:$0xff] %v221
        %229 = vst [vmem:[%s164 + $0x18] sm:$0xff] %v224
        %s230 = sand.u32 %s93, 1
        %s231 = scalar_lea.sflag [#allocation3], %s230
        %s232 = sand.u32 %s93, 1
        %s233 = smul.addr %s232, 32
        %s234 = scalar_lea.vmem [#allocation2], %s233
        // Predicated region
        $region33: #{tpu_custom_call.1} parent=31 // pred_check
          %p235 = pneg %p103
        $region34: #{tpu_custom_call.1} parent=31 // pred_check_branch
          %237 = sbr.rel (%p235) target = $region36
        $region35: #{tpu_custom_call.1} parent=31 // pred_region
          %s238 = smul.u32 4, %s17
          %240 = vsyncadd %s231, 0
          %s241 = smul.addr %s238, 8
          %s242 = scalar_lea.hbm %s3, %s241
          %s243 = sshll.u32 %s234, 4
          %s244 = int_to_ptr.vmem [resolvable:$true] %s243
          %s245 = sshll.u32 %s242, 4
          %s246 = int_to_ptr.hbm [resolvable:$true] %s245
          %251 = dma.vmem_to_hbm [thread:$0]  %s244, 512, %s246, %s231, 128, 128, 8
        $region36: #{tpu_custom_call.1} parent=31 // pred_fallthru
          _
      $region32: #{tpu_custom_call.1} parent=5 // pred_fallthru
        _
      %p252 = scmp.le.s32.totalorder 2, %s12
      // Predicated region
      $region37: #{tpu_custom_call.1} parent=5 // pred_check
        %p253 = pneg %p252
      $region38: #{tpu_custom_call.1} parent=5 // pred_check_branch
        %255 = sbr.rel (%p253) target = $region40
      $region39: #{tpu_custom_call.1} parent=5 // pred_region
        %s256 = ssub.s32 %s12, 2
        // Predicated region
        $region41: #{tpu_custom_call.1} parent=39 // pred_check
          %p257 = pneg %p109
        $region42: #{tpu_custom_call.1} parent=39 // pred_check_branch
          %259 = sbr.rel (%p257) target = $region44
        $region43: #{tpu_custom_call.1} parent=39 // pred_region
          %s260 = sand.u32 %s94, 1
          %s261 = scalar_lea.sflag [#allocation3], %s260
          %s262 = sand.u32 %s94, 1
          %s263 = smul.addr %s262, 32
          %s264 = scalar_lea.vmem [#allocation2], %s263
          %266 = dma.done %s261, 512
        $region44: #{tpu_custom_call.1} parent=39 // pred_fallthru
          _
      $region40: #{tpu_custom_call.1} parent=5 // pred_fallthru
        _
    $region6: #{tpu_custom_call.1} parent=1 // loop_footer
      %s16 = sadd.s32 1, %s12
    $region7: #{tpu_custom_call.1} parent=1 // loop_footer_branch
      %11 = sbr.rel target = $region3
    $region8: #{tpu_custom_call.1} parent=1 // loop_exit
      _
    %267 = vsyncpa [#allocation3], 1
    %s268 = scalar_lea.sflag [#allocation3], 1
    %269 = vsyncpa %s268, 1

</llo_original>
